<compile_context>
chip_gen: v6e
topology: v6e:2x2x1
jax: 0.10.0
libtpu: 0.0.40
codegen_flags: <defaults>
</compile_context>

<pallas_src>
import jax
import jax.numpy as jnp
from jax.experimental import pallas as pl
from jax.experimental.pallas import tpu as pltpu


def _round_up(n, m):
    return -(-n // m) * m


def _tpu_hw():
    """(vmem_capacity_bytes, num_tensorcores) with conservative fallbacks."""
    vmem_cap = 64 * 1024 * 1024          # v7x per-TC value: safe lower bound everywhere
    cores = None
    try:
        info = pltpu.get_tpu_info()
        vmem_cap = int(getattr(info, "vmem_capacity_bytes", vmem_cap)) or vmem_cap
        for name in ("num_tensorcores", "tensorcores_per_chip", "num_cores",
                     "core_count", "cores_per_chip"):
            v = getattr(info, name, None)
            if v:
                cores = int(v)
                break
    except Exception:
        pass
    if cores is None:
        try:   # v7x has 2 TensorCores/chip; v5e/v6e have 1.
            cores = 2 if "v7" in jax.devices()[0].device_kind.lower() else 1
        except Exception:
            cores = 1
    return vmem_cap, max(1, cores)


def _pick_tile_b(batch, d, itemsize, target_bytes, sublane):
    """Largest row tile (sublane-aligned) keeping each pipeline buffer <= target."""
    t = (target_bytes // max(1, d * itemsize)) // sublane * sublane
    t = max(sublane, t)
    return min(t, _round_up(batch, sublane))


def _bce_sum_kernel(xp_ref, x_ref, out_ref, acc_ref):
    i = pl.program_id(1)                  # tile index within this shard (reduction axis)

    @pl.when(i == 0)
    def _init():
        acc_ref[...] = jnp.zeros_like(acc_ref)

    # ---- Binary cross entropy, reduction='sum' (torch clamps logs at -100) ----
    xp = xp_ref[...].astype(jnp.float32)
    x = x_ref[...].astype(jnp.float32)
    log_p = jnp.maximum(jnp.log(xp), -100.0)
    log_1mp = jnp.maximum(jnp.log(1.0 - xp), -100.0)
    # Strength-reduced: -(x*log_p + (1-x)*log_1mp) == -(x*(log_p - log_1mp) + log_1mp)
    bce = -(x * (log_p - log_1mp) + log_1mp)
    # Lane-dense partial accumulator: per-tile sublane reduce (XLU, idle otherwise)
    # instead of re-reading/re-writing a full (tile_b, d) f32 tile each step.
    acc_ref[...] += jnp.sum(bce, axis=0, keepdims=True)

    # ---- Epilogue: emit this shard's lane-dense partial once -----------------
    @pl.when(i == pl.num_programs(1) - 1)
    def _fin():
        out_ref[0] = acc_ref[...]


def elbo(x_prime, x, mu, std, *, tile_b=None, compute_dtype=jnp.bfloat16):
    """Scalar ELBO loss matching the PyTorch module's forward()."""
    assert x_prime.shape == x.shape and x.ndim == 2
    assert mu.shape == std.shape and mu.ndim == 2

    batch, d = x.shape

    # --- KL(N(mu,std) || N(0,1)): tiny, lane-hostile layout -> plain XLA reduce.
    m = mu.astype(jnp.float32)
    s = std.astype(jnp.float32)
    kl_sum = jnp.sum(-jnp.log(s) + 0.5 * (s * s + m * m - 1.0))

    # --- BCE term via Pallas, on bf16 inputs (half the HBM traffic). -----------
    xp = x_prime.astype(compute_dtype)
    xx = x.astype(compute_dtype)
    itemsize = jnp.dtype(compute_dtype).itemsize
    sublane = max(8, 32 // max(1, itemsize))       # 8 for f32, 16 for bf16

    vmem_cap, cores = _tpu_hw()
    if vmem_cap >= 100 * 1024 * 1024:              # v5e / v6e: 128 MiB VMEM
        target_bytes, vmem_limit = 8 * 1024 * 1024, 64 * 1024 * 1024
    else:                                          # v7x: 64 MiB VMEM per TensorCore
        target_bytes, vmem_limit = 6 * 1024 * 1024, 48 * 1024 * 1024

    if tile_b is None:
        tile_b = _pick_tile_b(batch, d, itemsize, target_bytes, sublane)
    else:
        tile_b = max(sublane, _round_up(int(tile_b), sublane))

    n_tiles = -(-batch // tile_b)
    num_shards = min(cores, n_tiles) if n_tiles >= 2 else 1
    chunk = tile_b * num_shards
    padded_b = _round_up(batch, chunk)
    tiles_per_shard = padded_b // chunk

    if padded_b != batch:
        pad = padded_b - batch
        # Zero padding contributes exactly 0 to the clamped BCE sum:
        #   x=0, p=0 -> x*max(log 0, -100) = 0 and (1-x)*log(1-0) = 0.
        xp = jnp.pad(xp, ((0, pad), (0, 0)))
        xx = jnp.pad(xx, ((0, pad), (0, 0)))

    def data_map(s_, i_):
        return (s_ * tiles_per_shard + i_, 0)

    cost = pl.CostEstimate(
        flops=7 * padded_b * d,
        transcendentals=2 * padded_b * d,
        bytes_accessed=2 * padded_b * d * itemsize + 4 * num_shards * d,
    )

    partials = pl.pallas_call(
        _bce_sum_kernel,
        out_shape=jax.ShapeDtypeStruct((num_shards, 1, d), jnp.float32),
        grid_spec=pltpu.PrefetchScalarGridSpec(
            num_scalar_prefetch=0,
            grid=(num_shards, tiles_per_shard),
            in_specs=[
                pl.BlockSpec((tile_b, d), data_map),   # x_prime tile (pipelined)
                pl.BlockSpec((tile_b, d), data_map),   # x       tile (pipelined)
            ],
            out_specs=pl.BlockSpec((1, 1, d), lambda s_, i_: (s_, 0, 0)),
            scratch_shapes=[pltpu.VMEM((1, d), jnp.float32)],
        ),
        compiler_params=pltpu.CompilerParams(
            dimension_semantics=("parallel", "arbitrary"),
            vmem_limit_bytes=vmem_limit,
        ),
        cost_estimate=cost,
    )(xp, xx)

    bce_sum = jnp.sum(partials)
    return (kl_sum + bce_sum) / batch


def _elbo_reference(x_prime, x, mu, std):
    # Pure-JAX reference (same math / f32 upcast) for correctness checks.
    xp = x_prime.astype(jnp.float32)
    xx = x.astype(jnp.float32)
    m = mu.astype(jnp.float32)
    s = std.astype(jnp.float32)
    kl = -jnp.log(s) + 0.5 * (s * s + m * m - 1.0)
    log_p = jnp.maximum(jnp.log(xp), -100.0)
    log_1mp = jnp.maximum(jnp.log(1.0 - xp), -100.0)
    bce = -(xx * log_p + (1.0 - xx) * log_1mp)
    return (jnp.sum(kl) + jnp.sum(bce)) / x.shape[0]


if __name__ == "__main__":
    key = jax.random.PRNGKey(0)

    def make_inputs(k, b, dim, latent):
        k1, k2, k3, k4 = jax.random.split(k, 4)
        xp = jax.nn.sigmoid(jax.random.normal(k1, (b, dim), dtype=jnp.float32))
        xx = jax.random.uniform(k2, (b, dim), dtype=jnp.float32)
        m = jax.random.normal(k3, (b, latent), dtype=jnp.float32)
        s = jax.nn.softplus(jax.random.normal(k4, (b, latent), dtype=jnp.float32)) + 1e-3
        return xp, xx, m, s

    k1, k2, k3 = jax.random.split(key, 3)

    # 1) Small single-tile case (nominal usage of the module), exact f32 path.
    xp, xx, m, s = make_inputs(k1, b=2, dim=256, latent=10)
    got = jax.block_until_ready(elbo(xp, xx, m, s, compute_dtype=jnp.float32))
    want = _elbo_reference(xp, xx, m, s)
    assert jnp.allclose(got, want, rtol=1e-5, atol=1e-3), (got, want)

    # 2) Multi-tile + ragged batch (forces padding / gridded path), default bf16 inputs.
    #    Compare against the reference evaluated on the same bf16-rounded inputs
    #    (identical math, only f32 summation order differs) ...
    xp, xx, m, s = make_inputs(k2, b=30, dim=256, latent=10)
    got = jax.block_until_ready(elbo(xp, xx, m, s, tile_b=16))
    want = _elbo_reference(xp.astype(jnp.bfloat16), xx.astype(jnp.bfloat16), m, s)
    assert jnp.allclose(got, want, rtol=1e-4, atol=1e-2), (got, want)
    #    ... and stays close to the full-precision reference (bf16 input rounding only).
    want_f32 = _elbo_reference(xp, xx, m, s)
    assert jnp.allclose(got, want_f32, rtol=2e-2, atol=5e-1), (got, want_f32)

    # 3) Default bf16 path on a tile-aligned batch.
    xp, xx, m, s = make_inputs(k3, b=16, dim=256, latent=10)
    got = jax.block_until_ready(elbo(xp, xx, m, s))
    want = _elbo_reference(xp.astype(jnp.bfloat16), xx.astype(jnp.bfloat16), m, s)
    assert jnp.allclose(got, want, rtol=1e-4, atol=1e-2), (got, want)

    print("KERNEL_OK")
</pallas_src>

<mosaic_0001>
module attributes {stable_mosaic.version = 11 : i64} {
  func.func @_bce_sum_kernel(%arg0: i32, %arg1: i32, %arg2: memref<8x256xf32, #tpu.memory_space<vmem>>, %arg3: memref<8x256xf32, #tpu.memory_space<vmem>>, %arg4: memref<1x1x256xf32, #tpu.memory_space<vmem>>, %arg5: memref<1x256xf32, #tpu.memory_space<vmem>>) attributes {dimension_semantics = [#tpu.dimension_semantics<parallel>, #tpu.dimension_semantics<arbitrary>], iteration_bounds = array<i64: 1, 1>, scalar_prefetch = 0 : i64, scratch_operands = 1 : i64, tpu.core_type = #tpu.core_type<tc>, window_params = [{transform_indices = @transform_0, window_bounds = array<i64: 8, 256>}, {transform_indices = @transform_1, window_bounds = array<i64: 8, 256>}, {transform_indices = @transform_2, window_bounds = array<i64: 1, 1, 256>}]} {
    %c0_i32 = arith.constant 0 : i32
    %0 = arith.cmpi eq, %arg1, %c0_i32 : i32
    %1 = arith.extui %0 : i1 to i32
    %c0_i32_0 = arith.constant 0 : i32
    %2 = arith.cmpi ne, %1, %c0_i32_0 : i32
    scf.if %2 {
      %cst_14 = arith.constant 0.000000e+00 : f32
      %26 = vector.broadcast %cst_14 : f32 to vector<1x256xf32>
      %c0_15 = arith.constant 0 : index
      %c0_16 = arith.constant 0 : index
      %27 = vector.load %arg5[%c0_15, %c0_16] : memref<1x256xf32, #tpu.memory_space<vmem>>, vector<1x256xf32>
      tpu.vector_store %arg5[%c0_15, %c0_16], %26 {strides = array<i32>} : memref<1x256xf32, #tpu.memory_space<vmem>>, vector<1x256xf32>,
    } else {
    }
    %c0 = arith.constant 0 : index
    %c0_1 = arith.constant 0 : index
    %3 = vector.load %arg2[%c0, %c0_1] : memref<8x256xf32, #tpu.memory_space<vmem>>, vector<8x256xf32>
    %c0_2 = arith.constant 0 : index
    %c0_3 = arith.constant 0 : index
    %4 = vector.load %arg3[%c0_2, %c0_3] : memref<8x256xf32, #tpu.memory_space<vmem>>, vector<8x256xf32>
    %5 = math.log %3 : vector<8x256xf32>
    %cst = arith.constant -1.000000e+02 : f32
    %6 = vector.broadcast %cst : f32 to vector<8x256xf32>
    %7 = arith.maximumf %5, %6 : vector<8x256xf32>
    %cst_4 = arith.constant 1.000000e+00 : f32
    %8 = vector.broadcast %cst_4 : f32 to vector<8x256xf32>
    %9 = arith.subf %8, %3 : vector<8x256xf32>
    %10 = math.log %9 : vector<8x256xf32>
    %cst_5 = arith.constant -1.000000e+02 : f32
    %11 = vector.broadcast %cst_5 : f32 to vector<8x256xf32>
    %12 = arith.maximumf %10, %11 : vector<8x256xf32>
    %13 = arith.subf %7, %12 : vector<8x256xf32>
    %14 = arith.mulf %4, %13 : vector<8x256xf32>
    %15 = arith.addf %14, %12 : vector<8x256xf32>
    %cst_6 = arith.constant 0.000000e+00 : f32
    %16 = vector.broadcast %cst_6 : f32 to vector<8x256xf32>
    %17 = arith.subf %16, %15 : vector<8x256xf32>
    %c0_7 = arith.constant 0 : index
    %c0_8 = arith.constant 0 : index
    %18 = vector.load %arg5[%c0_7, %c0_8] : memref<1x256xf32, #tpu.memory_space<vmem>>, vector<1x256xf32>
    %cst_9 = arith.constant dense<0.000000e+00> : vector<256xf32>
    %19 = vector.multi_reduction <add>, %17, %cst_9 [0] : vector<8x256xf32> to vector<256xf32>
    %20 = vector.shape_cast %19 : vector<256xf32> to vector<1x256xf32>
    %21 = arith.addf %18, %20 : vector<1x256xf32>
    %c0_10 = arith.constant 0 : index
    %c0_11 = arith.constant 0 : index
    %22 = vector.load %arg5[%c0_10, %c0_11] : memref<1x256xf32, #tpu.memory_space<vmem>>, vector<1x256xf32>
    tpu.vector_store %arg5[%c0_10, %c0_11], %21 {strides = array<i32>} : memref<1x256xf32, #tpu.memory_space<vmem>>, vector<1x256xf32>,
    %c0_i32_12 = arith.constant 0 : i32
    %23 = arith.cmpi eq, %arg1, %c0_i32_12 : i32
    %24 = arith.extui %23 : i1 to i32
    %c0_i32_13 = arith.constant 0 : i32
    %25 = arith.cmpi ne, %24, %c0_i32_13 : i32
    scf.if %25 {
      %c0_14 = arith.constant 0 : index
      %c0_15 = arith.constant 0 : index
      %26 = vector.load %arg5[%c0_14, %c0_15] : memref<1x256xf32, #tpu.memory_space<vmem>>, vector<1x256xf32>
      %c0_16 = arith.constant 0 : index
      %c0_17 = arith.constant 0 : index
      %c0_18 = arith.constant 0 : index
      %27 = vector.load %arg4[%c0_16, %c0_17, %c0_18] : memref<1x1x256xf32, #tpu.memory_space<vmem>>, vector<1x1x256xf32>
      %28 = vector.shape_cast %27 : vector<1x1x256xf32> to vector<1x256xf32>
      %29 = vector.shape_cast %26 : vector<1x256xf32> to vector<1x1x256xf32>
      tpu.vector_store %arg4[%c0_16, %c0_17, %c0_18], %29 {strides = array<i32>} : memref<1x1x256xf32, #tpu.memory_space<vmem>>, vector<1x1x256xf32>,
    } else {
    }
    return
  }
  func.func @transform_0(%arg0: i32, %arg1: i32) -> (i32, i32) {
    %c1_i32 = arith.constant 1 : i32
    %0 = arith.muli %arg0, %c1_i32 : i32
    %1 = arith.addi %0, %arg1 : i32
    %c0_i32 = arith.constant 0 : i32
    %c0_i32_0 = arith.constant 0 : i32
    return %1, %c0_i32 : i32, i32
  }
  func.func @transform_1(%arg0: i32, %arg1: i32) -> (i32, i32) {
    %c1_i32 = arith.constant 1 : i32
    %0 = arith.muli %arg0, %c1_i32 : i32
    %1 = arith.addi %0, %arg1 : i32
    %c0_i32 = arith.constant 0 : i32
    %c0_i32_0 = arith.constant 0 : i32
    return %1, %c0_i32 : i32, i32
  }
  func.func @transform_2(%arg0: i32, %arg1: i32) -> (i32, i32, i32) {
    %c0_i32 = arith.constant 0 : i32
    %c0_i32_0 = arith.constant 0 : i32
    %c0_i32_1 = arith.constant 0 : i32
    return %arg0, %c0_i32, %c0_i32_0 : i32, i32, i32
  }
}

</mosaic_0001>

<llo_original>
// kernel: tpu_custom_call.1
$region0: #{tpu_custom_call.1}
  #allocation0 [shape = 'u32[]', space=smem, size = 0x4, offset = 0x4, fixed_abs, tag = 'smem constant byte address 0x4 - core index']
  #allocation1 [shape = 'u32[144,128]{1,0:T(1,128)}', space=vmem, size = 0x12000, scoped, tag = 'internal scratch']
  #allocation2 [shape = 'f32[1,256]{1,0:T(1,128)}', space=vmem, size = 0x400, scoped, tag = 'scratch operand']
  %s0 = inlined_call_operand.hbm [shape: f32[8,256], index: 0, kind: input, shape index: {}]
  %s1 = inlined_call_operand.hbm [shape: f32[8,256], index: 1, kind: input, shape index: {}]
  %s2 = inlined_call_operand.hbm [shape: f32[1,1,256], index: 2, kind: output, shape index: {}]
  %s3 = sld [smem:[#allocation0]]
  $region34: #{tpu_custom_call.1} parent=0
    _
  %s5 = ssub.s32 1, %s3
  %s6 = scalar_select 0, %s5, %s3
  $region1: #{tpu_custom_call.1} parent=0
    #allocation3 [shape = 'u8[8192]{0}', space=vmem, size = 0x2000, scoped, tag = 'input window, operand 0, single buffered']
    #allocation4 [shape = 's32[1]{0}', space=sflag, size = 0x4, scoped, tag = 'scoped memory for tpu_custom_call.1']
    #allocation5 [shape = 's32[1]{0}', space=sflag, size = 0x4, scoped, tag = 'scoped memory for tpu_custom_call.1']
    #allocation6 [shape = 'u8[8192]{0}', space=vmem, size = 0x2000, scoped, tag = 'input window, operand 1, single buffered']
    #allocation7 [shape = 's32[1]{0}', space=sflag, size = 0x4, scoped, tag = 'scoped memory for tpu_custom_call.1']
    #allocation8 [shape = 'u8[1024]{0}', space=vmem, size = 0x400, scoped, tag = 'output window, operand 0, single buffered']
    %7 = vsyncpa [#allocation4], 0
    %8 = vsyncpa [#allocation7], 0
    %9 = vsyncpa [#allocation5], 0
    // Predicated region
    $region2: #{tpu_custom_call.1} parent=1 // pred_check
      _
    $region3: #{tpu_custom_call.1} parent=1 // pred_check_branch
      %11 = sbr.rel (0) target = $region5
    $region4: #{tpu_custom_call.1} parent=1 // pred_region
      %s12 = sadd.s32 0, 0
      %s14 = ssub.s32 256, 256
      %15 = vsyncadd [#allocation4], %s14
      %s16 = smul.addr %s12, 2
      %s17 = smul.addr %s16, 128
      %s18 = scalar_lea.hbm %s0, %s17
      %s20 = sshll.u32 [#allocation3], 4
      %s21 = int_to_ptr.vmem [resolvable:$true] %s20
      %23 = dma.hbm_to_vmem [thread:$0]  %s18, 256, %s21, [#allocation4]
    $region5: #{tpu_custom_call.1} parent=1 // pred_fallthru
      _
    // Predicated region
    $region6: #{tpu_custom_call.1} parent=1 // pred_check
      _
    $region7: #{tpu_custom_call.1} parent=1 // pred_check_branch
      %25 = sbr.rel (0) target = $region9
    $region8: #{tpu_custom_call.1} parent=1 // pred_region
      %s26 = sadd.s32 0, 0
      %s28 = ssub.s32 256, 256
      %29 = vsyncadd [#allocation7], %s28
      %s30 = smul.addr %s26, 2
      %s31 = smul.addr %s30, 128
      %s32 = scalar_lea.hbm %s1, %s31
      %s34 = sshll.u32 [#allocation6], 4
      %s35 = int_to_ptr.vmem [resolvable:$true] %s34
      %37 = dma.hbm_to_vmem [thread:$0]  %s32, 256, %s35, [#allocation7]
    $region9: #{tpu_custom_call.1} parent=1 // pred_fallthru
      _
    // Predicated region
    $region10: #{tpu_custom_call.1} parent=1 // pred_check
      _
    $region11: #{tpu_custom_call.1} parent=1 // pred_check_branch
      %39 = sbr.rel (0) target = $region13
    $region12: #{tpu_custom_call.1} parent=1 // pred_region
      %40 = dma.done [#allocation4], 256
    $region13: #{tpu_custom_call.1} parent=1 // pred_fallthru
      _
    // Predicated region
    $region14: #{tpu_custom_call.1} parent=1 // pred_check
      _
    $region15: #{tpu_custom_call.1} parent=1 // pred_check_branch
      %42 = sbr.rel (0) target = $region17
    $region16: #{tpu_custom_call.1} parent=1 // pred_region
      %43 = dma.done [#allocation7], 256
    $region17: #{tpu_custom_call.1} parent=1 // pred_fallthru
      _
    %s44 = sadd.s32 0, 0
    %s45 = sadd.s32 0, 0
    %p46 = scmp.eq.s32.totalorder 0, 0
    // Predicated region
    $region18: #{tpu_custom_call.1} parent=1 // pred_check
      %p47 = pneg %p46
    $region19: #{tpu_custom_call.1} parent=1 // pred_check_branch
      %49 = sbr.rel (%p47) target = $region21
    $region20: #{tpu_custom_call.1} parent=1 // pred_region
      %v50 = vlaneseq
      %vm51 = vcmp.ge.s32.totalorder %v50, 0
      %vm52 = vcmp.lt.s32.totalorder %v50, 256
      %vm53 = vmand %vm51, %vm52
      %54 = vst.msk [vmem:[#allocation2] sm:$0x3] %vm53, 0.0
    $region21: #{tpu_custom_call.1} parent=1 // pred_fallthru
      _
    %v55 = vld [vmem:[#allocation3] sm:$0xff]
    %v56 = vld [vmem:[#allocation3 + $0x8] sm:$0xff]
    %v57 = vld [vmem:[#allocation6] sm:$0xff]
    %v58 = vld [vmem:[#allocation6 + $0x8] sm:$0xff]
    %v59 = vlog2.pop %v55
    %v60 = vmul.f32 %v59, 0.6931472
    %v61 = vlog2.pop %v56
    %v62 = vmul.f32 %v61, 0.6931472
    %v63 = vmax.f32 %v60, -100.0
    %v64 = vmax.f32 %v62, -100.0
    %v65 = vsub.f32 1.0, %v55
    %v66 = vsub.f32 1.0, %v56
    %v67 = vlog2.pop %v65
    %v68 = vmul.f32 %v67, 0.6931472
    %v69 = vlog2.pop %v66
    %v70 = vmul.f32 %v69, 0.6931472
    %v71 = vmax.f32 %v68, -100.0
    %v72 = vmax.f32 %v70, -100.0
    %v73 = vsub.f32 %v63, %v71
    %v74 = vsub.f32 %v64, %v72
    %v75 = vmul.f32 %v57, %v73
    %v76 = vmul.f32 %v58, %v74
    %v77 = vadd.f32 %v75, %v71
    %v78 = vadd.f32 %v76, %v72
    %v79 = vsub.f32 0.0, %v77
    %v80 = vsub.f32 0.0, %v78
    %v81 = vld [vmem:[#allocation2] sm:$0x3]
    %v82 = vrot.slane %v79, 4
    %v83 = vadd.f32 %v79, %v82
    %v84 = vrot.slane %v83, 2
    %v85 = vadd.f32 %v83, %v84
    %v86 = vrot.slane %v85, 1
    %v87 = vadd.f32 %v85, %v86
    %v88 = vrot.slane %v80, 4
    %v89 = vadd.f32 %v80, %v88
    %v90 = vrot.slane %v89, 2
    %v91 = vadd.f32 %v89, %v90
    %v92 = vrot.slane %v91, 1
    %v93 = vadd.f32 %v91, %v92
    %v96 = vcombine.low %v87, %v93
    %v98 = vunpack.c.l.s4 1966171168
    %v99 = vunpack.c.0.s8 %v98
    %v100 = vlaneseq
    %v101 = vshrl.u32 %v100, 7
    %v102 = vsub.s32 %v99, %v101
    %v103 = vrot.slane %v96, %v102
    %v105 = vunpack.c.l.s4 1966171168
    %v106 = vunpack.c.0.s8 %v105
    %v107 = vlaneseq
    %v108 = vshrl.u32 %v107, 7
    %v109 = vsub.s32 %v106, %v108
    %v110 = vrot.slane %v103, %v109
    %v112 = vadd.f32 %v81, %v110
    %v113 = vlaneseq
    %vm114 = vcmp.ge.s32.totalorder %v113, 0
    %vm115 = vcmp.lt.s32.totalorder %v113, 256
    %vm116 = vmand %vm114, %vm115
    %117 = vst.msk [vmem:[#allocation2] sm:$0x3] %vm116, %v112
    // Predicated region
    $region22: #{tpu_custom_call.1} parent=1 // pred_check
      %p118 = pneg %p46
    $region23: #{tpu_custom_call.1} parent=1 // pred_check_branch
      %120 = sbr.rel (%p118) target = $region25
    $region24: #{tpu_custom_call.1} parent=1 // pred_region
      %v121 = vld [vmem:[#allocation2] sm:$0x3]
      %122 = vst.msk [vmem:[#allocation8] sm:$0x3] %vm116, %v121
    $region25: #{tpu_custom_call.1} parent=1 // pred_fallthru
      _
    // Predicated region
    $region26: #{tpu_custom_call.1} parent=1 // pred_check
      _
    $region27: #{tpu_custom_call.1} parent=1 // pred_check_branch
      %124 = sbr.rel (0) target = $region29
    $region28: #{tpu_custom_call.1} parent=1 // pred_region
      %s126 = ssub.s32 32, 32
      %127 = vsyncadd [#allocation5], %s126
      %s129 = sshll.u32 [#allocation8], 4
      %s130 = int_to_ptr.vmem [resolvable:$true] %s129
      %132 = dma.vmem_to_hbm [thread:$0]  %s130, 32, %s2, [#allocation5]
    $region29: #{tpu_custom_call.1} parent=1 // pred_fallthru
      _
    // Predicated region
    $region30: #{tpu_custom_call.1} parent=1 // pred_check
      _
    $region31: #{tpu_custom_call.1} parent=1 // pred_check_branch
      %134 = sbr.rel (0) target = $region33
    $region32: #{tpu_custom_call.1} parent=1 // pred_region
      %135 = dma.done [#allocation5], 32
    $region33: #{tpu_custom_call.1} parent=1 // pred_fallthru
      _
    %136 = vsyncpa [#allocation4], 1
    %137 = vsyncpa [#allocation7], 1
    %138 = vsyncpa [#allocation5], 1

</llo_original>
